<compile_context>
chip_gen: v7x
topology: tpu7x:2x2x1
jax: 0.10.0
libtpu: 0.0.40
codegen_flags: <defaults>
</compile_context>

<pallas_src>
import functools
import math

import jax
import jax.numpy as jnp
from jax.experimental import pallas as pl
from jax.experimental.pallas import tpu as pltpu


def _cdiv(a, b):
    return -(-a // b)


# ---------------------------------------------------------------------------
# Pallas kernel: batch-merged MLP + per-batch softmax over the pool dimension
# ---------------------------------------------------------------------------
def _mlp_softmax_kernel(x_ref, w1_ref, b1_ref, w2_ref, b2_ref, w3_ref, b3_ref,
                        o_ref, *, p, seed):
    # x_ref : (TB, P, D) bf16        w1_ref: (D, 512) bf16   b1_ref: (1, 512) f32
    # w2_ref: (512, 256) bf16        b2_ref: (1, 256) f32
    # w3_ref: (1, 256) f32 (third Linear as a row vector)    b3_ref: (1, 1) f32
    # o_ref : (1, P, TB) f32 (lane-dense: merged-batch axis on lanes)
    tb, pool, d = x_ref.shape
    m = tb * pool
    x = x_ref[...].reshape(m, d)                              # (M, D) bf16

    # Linear1 (+ dropout) + ReLU  -- bf16 MXU inputs, f32 accumulation.
    h = jnp.dot(x, w1_ref[...], preferred_element_type=jnp.float32) + b1_ref[...]

    if p > 0.0:
        # TODO(synk): dropout RNG cannot bit-match PyTorch's RNG stream (and
        # the pattern depends on the TB grid tiling); keep/scale semantics
        # match F.dropout(training=True).  Requires a real TPU (hardware PRNG).
        pltpu.prng_seed(seed, pl.program_id(0))
        bits = pltpu.bitcast(pltpu.prng_random_bits((m, 512)), jnp.uint32)
        t16 = jnp.uint32(min(int(p * 65536.0), 65535))        # p * 2^16
        scale = 1.0 / (1.0 - p)
        keep1 = (bits >> 16) >= t16                           # hi 16 bits
        h = jnp.where(keep1, h * scale, 0.0)
    h = jnp.maximum(h, 0.0)

    # Linear2 (+ dropout) + ReLU
    h = jnp.dot(h.astype(jnp.bfloat16), w2_ref[...],
                preferred_element_type=jnp.float32) + b2_ref[...]
    if p > 0.0:
        keep2 = (bits[:, :256] & jnp.uint32(0xFFFF)) >= t16   # lo 16 bits
        h = jnp.where(keep2, h * scale, 0.0)
    h = jnp.maximum(h, 0.0)                                   # (M, 256) f32

    # Linear3 has out_features=1: lane reduction (VPU/XLU) instead of a
    # degenerate N=1 MXU matmul.
    h3 = h.reshape(tb, pool, h.shape[-1])                     # (TB, P, 256)
    logits = jnp.sum(h3 * w3_ref[...], axis=-1) + b3_ref[...]  # (TB, P)

    # Softmax over the pool axis, independently per batch element.  Transpose
    # so the (large) merged-batch axis sits on lanes: full-width VPU work and
    # unmasked lane-dense output stores.
    lt = jnp.transpose(logits)                                # (P, TB)
    e = jnp.exp(lt - jnp.max(lt, axis=0, keepdims=True))
    o_ref[0] = e / jnp.sum(e, axis=0, keepdims=True)


# ---------------------------------------------------------------------------
# Wrapper
# ---------------------------------------------------------------------------
def small_embed_ffnn_forward(x, params, embedding_dim, p=0.0, seed=0):
    """x: (B, P, 35) float32. Returns (B, P, 1) float32 (softmax over pool)."""
    B, P, F = x.shape
    assert F == 35
    E = embedding_dim
    D = 35 * E
    p = float(p)
    if not 0.0 <= p < 1.0:
        raise ValueError("dropout probability p must be in [0, 1)")

    # --- glue: fused embedding lookup (single gather over a stacked bf16
    # table; the concat output is already bf16 -> no pad / extra cast pass) ---
    cont = jnp.repeat(x[:, :, :2], E, axis=2).astype(jnp.bfloat16)       # (B,P,2E)
    idx = x[:, :, 2:].astype(jnp.int32) + params["emb_offsets"]          # (B,P,33)
    gathered = jnp.take(params["emb_stacked"], idx, axis=0)              # (B,P,33,E) bf16
    x_emb = jnp.concatenate([cont, gathered.reshape(B, P, 33 * E)], axis=2)

    w1, b1 = params["w1"], params["b1"]          # (D,512) bf16, (1,512) f32
    w2, b2 = params["w2"], params["b2"]          # (512,256) bf16, (1,256) f32
    w3_row, b3 = params["w3_row"], params["b3"]  # (1,256) f32, (1,1) f32

    # --- batch-merged tiling: M = TB*P rows per grid step, target ~1024 rows
    # (multiple of 256 when possible).  No forced multi-step split: the grid
    # is a serial loop on single-TC chips; on v7x megacore still shards when
    # the batch is large enough for NB >= 2. -----------------------------------
    rows = B * P
    target_m = min(1024, rows)
    if target_m >= 256:
        target_m = (target_m // 256) * 256
    TB = min(B, max(1, target_m // P))
    NB = _cdiv(B, TB)
    B_pad = NB * TB
    if B_pad != B:
        x_emb = jnp.pad(x_emb, ((0, B_pad - B), (0, 0), (0, 0)))

    kernel = functools.partial(_mlp_softmax_kernel, p=p, seed=int(seed))

    out = pl.pallas_call(
        kernel,
        out_shape=jax.ShapeDtypeStruct((NB, P, TB), jnp.float32),
        grid_spec=pltpu.PrefetchScalarGridSpec(
            num_scalar_prefetch=0,
            grid=(NB,),
            in_specs=[
                pl.BlockSpec((TB, P, D), lambda b: (b, 0, 0)),
                pl.BlockSpec(w1.shape, lambda b: (0, 0)),
                pl.BlockSpec(b1.shape, lambda b: (0, 0)),
                pl.BlockSpec(w2.shape, lambda b: (0, 0)),
                pl.BlockSpec(b2.shape, lambda b: (0, 0)),
                pl.BlockSpec(w3_row.shape, lambda b: (0, 0)),
                pl.BlockSpec(b3.shape, lambda b: (0, 0)),
            ],
            out_specs=pl.BlockSpec((1, P, TB), lambda b: (b, 0, 0)),
        ),
        compiler_params=pltpu.CompilerParams(
            dimension_semantics=("parallel",),
            vmem_limit_bytes=32 * 1024 * 1024),
    )(x_emb, w1, b1, w2, b2, w3_row, b3)

    # (NB, P, TB) -> (B_pad, P) -> (B, P, 1)
    probs = jnp.transpose(out, (0, 2, 1)).reshape(B_pad, P)[:B]
    return probs.reshape(B, P, 1)


# ---------------------------------------------------------------------------
# Deterministic parameter construction (synthetic, mirrors module __init__)
# ---------------------------------------------------------------------------
def make_params(key, embedding_dim, vocab_sizes):
    n_emb = len(vocab_sizes)
    keys = jax.random.split(key, n_emb + 6)

    # 33 embedding tables (nn.Embedding init ~ N(0,1)), stacked into a single
    # (sum_vocab, E) table with per-feature row offsets; stored bf16 so the
    # gather output feeds the MXU without an extra cast pass.
    tables = [jax.random.normal(keys[i], (v, embedding_dim), jnp.float32)
              for i, v in enumerate(vocab_sizes)]
    emb_stacked = jnp.concatenate(tables, axis=0).astype(jnp.bfloat16)
    offs, acc = [], 0
    for v in vocab_sizes:
        offs.append(acc)
        acc += v
    emb_offsets = jnp.asarray(offs, dtype=jnp.int32)

    def linear(kw, kb, fan_in, fan_out):
        bound = 1.0 / math.sqrt(fan_in)
        w = jax.random.uniform(kw, (fan_in, fan_out), jnp.float32, -bound, bound)
        b = jax.random.uniform(kb, (1, fan_out), jnp.float32, -bound, bound)
        return w, b

    D = 35 * embedding_dim
    w1, b1 = linear(keys[n_emb + 0], keys[n_emb + 1], D, 512)
    w2, b2 = linear(keys[n_emb + 2], keys[n_emb + 3], 512, 256)
    w3, b3 = linear(keys[n_emb + 4], keys[n_emb + 5], 256, 1)

    # MXU inputs pre-cast to bf16 at weight-prep (biases stay f32, added after
    # f32 accumulation); third Linear kept as an f32 row vector for the
    # lane-reduction epilogue.
    return {"emb_stacked": emb_stacked, "emb_offsets": emb_offsets,
            "w1": w1.astype(jnp.bfloat16), "b1": b1,
            "w2": w2.astype(jnp.bfloat16), "b2": b2,
            "w3_row": w3.T, "b3": b3}


if __name__ == "__main__":
    key = jax.random.PRNGKey(0)
    k_x1, k_x2, k_p = jax.random.split(key, 3)

    batch, pool, embedding_dim = 2, 8, 8
    vocab_sizes = [11 + (i % 7) for i in range(33)]  # synthetic feature_dict sizes

    params = make_params(k_p, embedding_dim, vocab_sizes)

    # input: (B, P, 35); first 2 features continuous, rest categorical indices
    cont = jax.random.uniform(k_x1, (batch, pool, 2), jnp.float32)
    kk = jax.random.split(k_x2, 33)
    cats = [jax.random.randint(kk[j], (batch, pool, 1), 0, v).astype(jnp.float32)
            for j, v in enumerate(vocab_sizes)]
    x = jnp.concatenate([cont] + cats, axis=2)       # (2, 8, 35) float32

    # deterministic forward (dropout no-op).  The p>0 path uses the TPU
    # hardware PRNG and is only available on a real TPU (not interpret mode),
    # so it is not exercised here.
    out = small_embed_ffnn_forward(x, params, embedding_dim, p=0.0)
    out = jax.block_until_ready(out)
    assert out.shape == (batch, pool, 1)
    assert jnp.allclose(jnp.sum(out, axis=1), 1.0, atol=1e-4)

    print("KERNEL_OK")
</pallas_src>

<mosaic_0001>
module attributes {stable_mosaic.version = 11 : i64} {
  func.func @_mlp_softmax_kernel(%arg0: i32, %arg1: memref<2x8x280xbf16, #tpu.memory_space<vmem>>, %arg2: memref<280x512xbf16, #tpu.memory_space<vmem>>, %arg3: memref<1x512xf32, #tpu.memory_space<vmem>>, %arg4: memref<512x256xbf16, #tpu.memory_space<vmem>>, %arg5: memref<1x256xf32, #tpu.memory_space<vmem>>, %arg6: memref<1x256xf32, #tpu.memory_space<vmem>>, %arg7: memref<1x1xf32, #tpu.memory_space<vmem>>, %arg8: memref<1x8x2xf32, #tpu.memory_space<vmem>>) attributes {dimension_semantics = [#tpu.dimension_semantics<parallel>], iteration_bounds = array<i64: 1>, scalar_prefetch = 0 : i64, scratch_operands = 0 : i64, tpu.core_type = #tpu.core_type<tc>, window_params = [{transform_indices = @transform_0, window_bounds = array<i64: 2, 8, 280>}, {pipeline_mode = #tpu.pipeline_mode<synchronous>, transform_indices = @transform_1, window_bounds = array<i64: 280, 512>}, {pipeline_mode = #tpu.pipeline_mode<synchronous>, transform_indices = @transform_2, window_bounds = array<i64: 1, 512>}, {pipeline_mode = #tpu.pipeline_mode<synchronous>, transform_indices = @transform_3, window_bounds = array<i64: 512, 256>}, {pipeline_mode = #tpu.pipeline_mode<synchronous>, transform_indices = @transform_4, window_bounds = array<i64: 1, 256>}, {pipeline_mode = #tpu.pipeline_mode<synchronous>, transform_indices = @transform_5, window_bounds = array<i64: 1, 256>}, {pipeline_mode = #tpu.pipeline_mode<synchronous>, transform_indices = @transform_6, window_bounds = array<i64: 1, 1>}, {transform_indices = @transform_7, window_bounds = array<i64: 1, 8, 2>}]} {
    %c0 = arith.constant 0 : index
    %c0_0 = arith.constant 0 : index
    %c0_1 = arith.constant 0 : index
    %0 = vector.load %arg1[%c0, %c0_0, %c0_1] : memref<2x8x280xbf16, #tpu.memory_space<vmem>>, vector<2x8x280xbf16>
    %1 = vector.shape_cast %0 : vector<2x8x280xbf16> to vector<16x280xbf16>
    %c0_2 = arith.constant 0 : index
    %c0_3 = arith.constant 0 : index
    %2 = vector.load %arg2[%c0_2, %c0_3] : memref<280x512xbf16, #tpu.memory_space<vmem>>, vector<280x512xbf16>
    %cst = arith.constant dense<0.000000e+00> : vector<16x512xf32>
    %3 = tpu.matmul %1, %2, %cst {dimension_numbers = #tpu.dot_dimension_numbers<[1], [0], [0], [1], [0, 0, 1, 1], [], []>} : vector<16x280xbf16>, vector<280x512xbf16>, vector<16x512xf32> -> vector<16x512xf32>
    %c0_4 = arith.constant 0 : index
    %c0_5 = arith.constant 0 : index
    %4 = vector.load %arg3[%c0_4, %c0_5] : memref<1x512xf32, #tpu.memory_space<vmem>>, vector<1x512xf32>
    %5 = vector.broadcast %4 : vector<1x512xf32> to vector<16x512xf32>
    %6 = arith.addf %3, %5 : vector<16x512xf32>
    %cst_6 = arith.constant 0.000000e+00 : f32
    %7 = vector.broadcast %cst_6 : f32 to vector<16x512xf32>
    %8 = arith.maximumf %6, %7 : vector<16x512xf32>
    %9 = arith.truncf %8 : vector<16x512xf32> to vector<16x512xbf16>
    %c0_7 = arith.constant 0 : index
    %c0_8 = arith.constant 0 : index
    %10 = vector.load %arg4[%c0_7, %c0_8] : memref<512x256xbf16, #tpu.memory_space<vmem>>, vector<512x256xbf16>
    %cst_9 = arith.constant dense<0.000000e+00> : vector<16x256xf32>
    %11 = tpu.matmul %9, %10, %cst_9 {dimension_numbers = #tpu.dot_dimension_numbers<[1], [0], [0], [1], [0, 0, 1, 1], [], []>} : vector<16x512xbf16>, vector<512x256xbf16>, vector<16x256xf32> -> vector<16x256xf32>
    %c0_10 = arith.constant 0 : index
    %c0_11 = arith.constant 0 : index
    %12 = vector.load %arg5[%c0_10, %c0_11] : memref<1x256xf32, #tpu.memory_space<vmem>>, vector<1x256xf32>
    %13 = vector.broadcast %12 : vector<1x256xf32> to vector<16x256xf32>
    %14 = arith.addf %11, %13 : vector<16x256xf32>
    %cst_12 = arith.constant 0.000000e+00 : f32
    %15 = vector.broadcast %cst_12 : f32 to vector<16x256xf32>
    %16 = arith.maximumf %14, %15 : vector<16x256xf32>
    %17 = vector.shape_cast %16 : vector<16x256xf32> to vector<2x8x256xf32>
    %c0_13 = arith.constant 0 : index
    %c0_14 = arith.constant 0 : index
    %18 = vector.load %arg6[%c0_13, %c0_14] : memref<1x256xf32, #tpu.memory_space<vmem>>, vector<1x256xf32>
    %19 = vector.shape_cast %18 : vector<1x256xf32> to vector<1x1x256xf32>
    %20 = vector.broadcast %19 : vector<1x1x256xf32> to vector<2x8x256xf32>
    %21 = arith.mulf %17, %20 : vector<2x8x256xf32>
    %cst_15 = arith.constant dense<0.000000e+00> : vector<2x8xf32>
    %22 = vector.multi_reduction <add>, %21, %cst_15 [2] : vector<2x8x256xf32> to vector<2x8xf32>
    %c0_16 = arith.constant 0 : index
    %c0_17 = arith.constant 0 : index
    %23 = vector.load %arg7[%c0_16, %c0_17] : memref<1x1xf32, #tpu.memory_space<vmem>>, vector<1x1xf32>
    %24 = vector.broadcast %23 : vector<1x1xf32> to vector<2x8xf32>
    %25 = arith.addf %22, %24 : vector<2x8xf32>
    %26 = tpu.transpose %25, [1, 0] : vector<2x8xf32> -> vector<8x2xf32>
    %cst_18 = arith.constant dense<0xFF800000> : vector<2xf32>
    %27 = vector.multi_reduction <maximumf>, %26, %cst_18 [0] : vector<8x2xf32> to vector<2xf32>
    %28 = vector.shape_cast %27 : vector<2xf32> to vector<1x2xf32>
    %29 = vector.broadcast %28 : vector<1x2xf32> to vector<8x2xf32>
    %30 = arith.subf %26, %29 : vector<8x2xf32>
    %31 = math.exp %30 : vector<8x2xf32>
    %cst_19 = arith.constant dense<0.000000e+00> : vector<2xf32>
    %32 = vector.multi_reduction <add>, %31, %cst_19 [0] : vector<8x2xf32> to vector<2xf32>
    %33 = vector.shape_cast %32 : vector<2xf32> to vector<1x2xf32>
    %34 = vector.broadcast %33 : vector<1x2xf32> to vector<8x2xf32>
    %35 = arith.divf %31, %34 : vector<8x2xf32>
    %c0_20 = arith.constant 0 : index
    %c0_21 = arith.constant 0 : index
    %c0_22 = arith.constant 0 : index
    %36 = vector.load %arg8[%c0_20, %c0_21, %c0_22] : memref<1x8x2xf32, #tpu.memory_space<vmem>>, vector<1x8x2xf32>
    %37 = vector.shape_cast %36 : vector<1x8x2xf32> to vector<8x2xf32>
    %38 = vector.shape_cast %35 : vector<8x2xf32> to vector<1x8x2xf32>
    tpu.vector_store %arg8[%c0_20, %c0_21, %c0_22], %38 {strides = array<i32>} : memref<1x8x2xf32, #tpu.memory_space<vmem>>, vector<1x8x2xf32>,
    return
  }
  func.func @transform_0(%arg0: i32) -> (i32, i32, i32) {
    %c0_i32 = arith.constant 0 : i32
    %c0_i32_0 = arith.constant 0 : i32
    %c0_i32_1 = arith.constant 0 : i32
    return %arg0, %c0_i32, %c0_i32_0 : i32, i32, i32
  }
  func.func @transform_1(%arg0: i32) -> (i32, i32) {
    %c0_i32 = arith.constant 0 : i32
    %c0_i32_0 = arith.constant 0 : i32
    %c0_i32_1 = arith.constant 0 : i32
    return %c0_i32, %c0_i32_0 : i32, i32
  }
  func.func @transform_2(%arg0: i32) -> (i32, i32) {
    %c0_i32 = arith.constant 0 : i32
    %c0_i32_0 = arith.constant 0 : i32
    %c0_i32_1 = arith.constant 0 : i32
    return %c0_i32, %c0_i32_0 : i32, i32
  }
  func.func @transform_3(%arg0: i32) -> (i32, i32) {
    %c0_i32 = arith.constant 0 : i32
    %c0_i32_0 = arith.constant 0 : i32
    %c0_i32_1 = arith.constant 0 : i32
    return %c0_i32, %c0_i32_0 : i32, i32
  }
  func.func @transform_4(%arg0: i32) -> (i32, i32) {
    %c0_i32 = arith.constant 0 : i32
    %c0_i32_0 = arith.constant 0 : i32
    %c0_i32_1 = arith.constant 0 : i32
    return %c0_i32, %c0_i32_0 : i32, i32
  }
  func.func @transform_5(%arg0: i32) -> (i32, i32) {
    %c0_i32 = arith.constant 0 : i32
    %c0_i32_0 = arith.constant 0 : i32
    %c0_i32_1 = arith.constant 0 : i32
    return %c0_i32, %c0_i32_0 : i32, i32
  }
  func.func @transform_6(%arg0: i32) -> (i32, i32) {
    %c0_i32 = arith.constant 0 : i32
    %c0_i32_0 = arith.constant 0 : i32
    %c0_i32_1 = arith.constant 0 : i32
    return %c0_i32, %c0_i32_0 : i32, i32
  }
  func.func @transform_7(%arg0: i32) -> (i32, i32, i32) {
    %c0_i32 = arith.constant 0 : i32
    %c0_i32_0 = arith.constant 0 : i32
    %c0_i32_1 = arith.constant 0 : i32
    return %arg0, %c0_i32, %c0_i32_0 : i32, i32, i32
  }
}

</mosaic_0001>

<llo_original>
// kernel: tpu_custom_call.1
$region0: #{tpu_custom_call.1}
  #allocation0 [shape = 'u32[]', space=smem, size = 0x4, offset = 0x4, fixed_abs, tag = 'smem constant byte address 0x4 - core index']
  #allocation1 [shape = 'u32[144,128]{1,0:T(1,128)}', space=vmem, size = 0x12000, scoped, tag = 'internal scratch']
  #allocation2 [shape = 'f32[1,1]{1,0:T(1,128)S(1)}', space=vmem, size = 0x200, scoped, tag = 'scoped memory for tpu_custom_call.1']
  %s0 = inlined_call_operand.hbm [shape: bf16[2,8,280], index: 0, kind: input, shape index: {}]
  %s1 = inlined_call_operand.hbm [shape: bf16[280,512], index: 1, kind: input, shape index: {}]
  %s2 = inlined_call_operand.vmem [shape: f32[1,512], index: 2, kind: input, shape index: {}]
  %s3 = inlined_call_operand.hbm [shape: bf16[512,256], index: 3, kind: input, shape index: {}]
  %s4 = inlined_call_operand.vmem [shape: f32[1,256], index: 4, kind: input, shape index: {}]
  %s5 = inlined_call_operand.vmem [shape: f32[1,256], index: 5, kind: input, shape index: {}]
  %s6 = inlined_call_operand.<no memory space> [shape: f32[1,1], index: 6, kind: input, shape index: {}]
  %s7 = inlined_call_operand.vmem [shape: f32[1,8,2], index: 7, kind: output, shape index: {}]
  %s8 = sld [smem:[#allocation0]]
  $region50: #{tpu_custom_call.1} parent=0
    _
  %s10 = ssub.s32 1, %s8
  %s11 = scalar_select 0, %s10, %s8
  %v12 = vstv %s6
  %13 = vst [vmem:[#allocation2] sm:$0x1] %v12
  $region1: #{tpu_custom_call.1} parent=0
    #allocation3 [shape = 'u8[12288]{0}', space=vmem, size = 0x3000, scoped, tag = 'input window, operand 0, single buffered']
    #allocation4 [shape = 's32[1]{0}', space=sflag, size = 0x4, scoped, tag = 'scoped memory for tpu_custom_call.1']
    #allocation5 [shape = 'u8[286720]{0}', space=vmem, size = 0x46000, scoped, tag = 'input window, operand 1, single buffered']
    #allocation6 [shape = 's32[1]{0}', space=sflag, size = 0x4, scoped, tag = 'scoped memory for tpu_custom_call.1']
    #allocation7 [shape = 'u8[262144]{0}', space=vmem, size = 0x40000, scoped, tag = 'input window, operand 3, single buffered']
    %14 = vsyncpa [#allocation4], 0
    %15 = vsyncpa [#allocation6], 0
    // Predicated region
    $region2: #{tpu_custom_call.1} parent=1 // pred_check
      _
    $region3: #{tpu_custom_call.1} parent=1 // pred_check_branch
      %17 = sbr.rel (0) target = $region5
    $region4: #{tpu_custom_call.1} parent=1 // pred_region
      %s19 = ssub.s32 384, 384
      %20 = vsyncadd [#allocation4], %s19
      %s21 = sshll.u32 [#allocation3], 4
      %s22 = int_to_ptr.vmem [resolvable:$true] %s21
      %27 = dma.hbm_to_vmem [thread:$0]  %s0, 384, %s22, [#allocation4], 192, 192, 12
    $region5: #{tpu_custom_call.1} parent=1 // pred_fallthru
      _
    // Predicated region
    $region6: #{tpu_custom_call.1} parent=1 // pred_check
      _
    $region7: #{tpu_custom_call.1} parent=1 // pred_check_branch
      %29 = sbr.rel (0) target = $region9
    $region8: #{tpu_custom_call.1} parent=1 // pred_region
      %s31 = ssub.s32 8960, 8960
      %32 = vsyncadd [#allocation6], %s31
      %s33 = sshll.u32 [#allocation5], 4
      %s34 = int_to_ptr.vmem [resolvable:$true] %s33
      %39 = dma.hbm_to_vmem [thread:$0]  %s1, 8960, %s34, [#allocation6], 256, 256, 16
    $region9: #{tpu_custom_call.1} parent=1 // pred_fallthru
      _
    // Predicated region
    $region10: #{tpu_custom_call.1} parent=1 // pred_check
      _
    $region11: #{tpu_custom_call.1} parent=1 // pred_check_branch
      %41 = sbr.rel (0) target = $region13
    $region12: #{tpu_custom_call.1} parent=1 // pred_region
      _
    $region13: #{tpu_custom_call.1} parent=1 // pred_fallthru
      _
    // Predicated region
    $region14: #{tpu_custom_call.1} parent=1 // pred_check
      _
    $region15: #{tpu_custom_call.1} parent=1 // pred_check_branch
      %43 = sbr.rel (0) target = $region17
    $region16: #{tpu_custom_call.1} parent=1 // pred_region
      %s45 = ssub.s32 8192, 8192
      %46 = vsyncadd [#allocation6], %s45
      %s47 = sshll.u32 [#allocation7], 4
      %s48 = int_to_ptr.vmem [resolvable:$true] %s47
      %53 = dma.hbm_to_vmem [thread:$0]  %s3, 8192, %s48, [#allocation6], 128, 128, 8
    $region17: #{tpu_custom_call.1} parent=1 // pred_fallthru
      _
    // Predicated region
    $region18: #{tpu_custom_call.1} parent=1 // pred_check
      _
    $region19: #{tpu_custom_call.1} parent=1 // pred_check_branch
      %55 = sbr.rel (0) target = $region21
    $region20: #{tpu_custom_call.1} parent=1 // pred_region
      _
    $region21: #{tpu_custom_call.1} parent=1 // pred_fallthru
      _
    // Predicated region
    $region22: #{tpu_custom_call.1} parent=1 // pred_check
      _
    $region23: #{tpu_custom_call.1} parent=1 // pred_check_branch
      %57 = sbr.rel (0) target = $region25
    $region24: #{tpu_custom_call.1} parent=1 // pred_region
      _
    $region25: #{tpu_custom_call.1} parent=1 // pred_fallthru
      _
    // Predicated region
    $region26: #{tpu_custom_call.1} parent=1 // pred_check
      _
    $region27: #{tpu_custom_call.1} parent=1 // pred_check_branch
      %59 = sbr.rel (0) target = $region29
    $region28: #{tpu_custom_call.1} parent=1 // pred_region
      _
    $region29: #{tpu_custom_call.1} parent=1 // pred_fallthru
      _
    // Predicated region
    $region30: #{tpu_custom_call.1} parent=1 // pred_check
      _
    $region31: #{tpu_custom_call.1} parent=1 // pred_check_branch
      %61 = sbr.rel (0) target = $region33
    $region32: #{tpu_custom_call.1} parent=1 // pred_region
      %62 = dma.done [#allocation4], 384
    $region33: #{tpu_custom_call.1} parent=1 // pred_fallthru
      _
    // Predicated region
    $region34: #{tpu_custom_call.1} parent=1 // pred_check
      _
    $region35: #{tpu_custom_call.1} parent=1 // pred_check_branch
      %64 = sbr.rel (0) target = $region37
    $region36: #{tpu_custom_call.1} parent=1 // pred_region
      %65 = dma.done [#allocation6], 8960
    $region37: #{tpu_custom_call.1} parent=1 // pred_fallthru
      _
    // Predicated region
    $region38: #{tpu_custom_call.1} parent=1 // pred_check
      _
    $region39: #{tpu_custom_call.1} parent=1 // pred_check_branch
      %67 = sbr.rel (0) target = $region41
    $region40: #{tpu_custom_call.1} parent=1 // pred_region
      %68 = dma.done [#allocation6], 8192
    $region41: #{tpu_custom_call.1} parent=1 // pred_fallthru
      _
    %v70 = vld [vmem:[#allocation3] sm:$0xff]
    %v71 = vld [vmem:[#allocation3 + $0x8] sm:$0xf]
    %v72 = vld [vmem:[#allocation3 + $0xc] sm:$0xff]
    %v73 = vld [vmem:[#allocation3 + $0x14] sm:$0xf]
    %v74 = vld [vmem:[#allocation5] sm:$0xff]
    %v75 = vld [vmem:[#allocation5 + $0x8] sm:$0xff]
    %v76 = vld [vmem:[#allocation5 + $0x10] sm:$0xff]
    %v77 = vld [vmem:[#allocation5 + $0x18] sm:$0xff]
    %v78 = vld [vmem:[#allocation5 + $0x20] sm:$0xff]
    %v79 = vld [vmem:[#allocation5 + $0x28] sm:$0xff]
    %v80 = vld [vmem:[#allocation5 + $0x30] sm:$0xff]
    %v81 = vld [vmem:[#allocation5 + $0x38] sm:$0xff]
    %v82 = vld [vmem:[#allocation5 + $0x40] sm:$0xff]
    %v83 = vld [vmem:[#allocation5 + $0x48] sm:$0xff]
    %v84 = vld [vmem:[#allocation5 + $0x50] sm:$0xff]
    %v85 = vld [vmem:[#allocation5 + $0x58] sm:$0xff]
    %v86 = vld [vmem:[#allocation5 + $0x60] sm:$0xff]
    %v87 = vld [vmem:[#allocation5 + $0x68] sm:$0xff]
    %v88 = vld [vmem:[#allocation5 + $0x70] sm:$0xff]
    %v89 = vld [vmem:[#allocation5 + $0x78] sm:$0xff]
    %v90 = vld [vmem:[#allocation5 + $0x80] sm:$0xff]
    %v91 = vld [vmem:[#allocation5 + $0x88] sm:$0xff]
    %v92 = vld [vmem:[#allocation5 + $0x90] sm:$0xff]
    %v93 = vld [vmem:[#allocation5 + $0x98] sm:$0xff]
    %v94 = vld [vmem:[#allocation5 + $0xa0] sm:$0xff]
    %v95 = vld [vmem:[#allocation5 + $0xa8] sm:$0xff]
    %v96 = vld [vmem:[#allocation5 + $0xb0] sm:$0xff]
    %v97 = vld [vmem:[#allocation5 + $0xb8] sm:$0xff]
    %v98 = vld [vmem:[#allocation5 + $0xc0] sm:$0xff]
    %v99 = vld [vmem:[#allocation5 + $0xc8] sm:$0xff]
    %v100 = vld [vmem:[#allocation5 + $0xd0] sm:$0xff]
    %v101 = vld [vmem:[#allocation5 + $0xd8] sm:$0xff]
    %v102 = vld [vmem:[#allocation5 + $0xe0] sm:$0xff]
    %v103 = vld [vmem:[#allocation5 + $0xe8] sm:$0xff]
    %v104 = vld [vmem:[#allocation5 + $0xf0] sm:$0xff]
    %v105 = vld [vmem:[#allocation5 + $0xf8] sm:$0xff]
    %v106 = vld [vmem:[#allocation5 + $0x100] sm:$0xff]
    %v107 = vld [vmem:[#allocation5 + $0x108] sm:$0xff]
    %v108 = vld [vmem:[#allocation5 + $0x110] sm:$0xff]
    %v109 = vld [vmem:[#allocation5 + $0x118] sm:$0xff]
    %v110 = vld [vmem:[#allocation5 + $0x120] sm:$0xff]
    %v111 = vld [vmem:[#allocation5 + $0x128] sm:$0xff]
    %v112 = vld [vmem:[#allocation5 + $0x130] sm:$0xff]
    %v113 = vld [vmem:[#allocation5 + $0x138] sm:$0xff]
    %v114 = vld [vmem:[#allocation5 + $0x140] sm:$0xff]
    %v115 = vld [vmem:[#allocation5 + $0x148] sm:$0xff]
    %v116 = vld [vmem:[#allocation5 + $0x150] sm:$0xff]
    %v117 = vld [vmem:[#allocation5 + $0x158] sm:$0xff]
    %v118 = vld [vmem:[#allocation5 + $0x160] sm:$0xff]
    %v119 = vld [vmem:[#allocation5 + $0x168] sm:$0xff]
    %v120 = vld [vmem:[#allocation5 + $0x170] sm:$0xff]
    %v121 = vld [vmem:[#allocation5 + $0x178] sm:$0xff]
    %v122 = vld [vmem:[#allocation5 + $0x180] sm:$0xff]
    %v123 = vld [vmem:[#allocation5 + $0x188] sm:$0xff]
    %v124 = vld [vmem:[#allocation5 + $0x190] sm:$0xff]
    %v125 = vld [vmem:[#allocation5 + $0x198] sm:$0xff]
    %v126 = vld [vmem:[#allocation5 + $0x1a0] sm:$0xff]
    %v127 = vld [vmem:[#allocation5 + $0x1a8] sm:$0xff]
    %v128 = vld [vmem:[#allocation5 + $0x1b0] sm:$0xff]
    %v129 = vld [vmem:[#allocation5 + $0x1b8] sm:$0xff]
    %v130 = vld [vmem:[#allocation5 + $0x1c0] sm:$0xff]
    %v131 = vld [vmem:[#allocation5 + $0x1c8] sm:$0xff]
    %v132 = vld [vmem:[#allocation5 + $0x1d0] sm:$0xff]
    %v133 = vld [vmem:[#allocation5 + $0x1d8] sm:$0xff]
    %v134 = vld [vmem:[#allocation5 + $0x1e0] sm:$0xff]
    %v135 = vld [vmem:[#allocation5 + $0x1e8] sm:$0xff]
    %v136 = vld [vmem:[#allocation5 + $0x1f0] sm:$0xff]
    %v137 = vld [vmem:[#allocation5 + $0x1f8] sm:$0xff]
    %v138 = vld [vmem:[#allocation5 + $0x200] sm:$0xff]
    %v139 = vld [vmem:[#allocation5 + $0x208] sm:$0xff]
    %v140 = vld [vmem:[#allocation5 + $0x210] sm:$0xff]
    %v141 = vld [vmem:[#allocation5 + $0x218] sm:$0xff]
    %v142 = vld [vmem:[#allocation5 + $0x220] sm:$0xff]
    %v143 = vld [vmem:[#allocation5 + $0x228] sm:$0xff]
    %v144 = vld [vmem:[%s2] sm:$0xf]
    %v146 = vlaneseq
    %v147 = vshrl.u32 %v146, 7
    %v148 = vsub.s32 0, %v147
    %v149 = vrot.slane %v144, %v148
    %v150 = vlaneseq
    %v151 = vshrl.u32 %v150, 7
    %v152 = vsub.s32 1, %v151
    %v153 = vrot.slane %v144, %v152
    %v154 = vlaneseq
    %v155 = vshrl.u32 %v154, 7
    %v156 = vsub.s32 2, %v155
    %v157 = vrot.slane %v144, %v156
    %v158 = vlaneseq
    %v159 = vshrl.u32 %v158, 7
    %v160 = vsub.s32 3, %v159
    %v161 = vrot.slane %v144, %v160
    %v170 = vunpack.c.l.b16 %v70
    %v171 = vunpack.c.h.b16 %v70
    %v172 = vunpack.c.l.b16 %v71
    %v173 = vunpack.c.l.b16 %v72
    %v174 = vunpack.c.h.b16 %v72
    %v175 = vunpack.c.l.b16 %v73
    %v176 = vpack.c.b16 %v173, %v170
    %v177 = vpack.c.b16 %v174, %v171
    %v178 = vpack.c.b16 %v175, %v172
    %v251 = vunpack.c.l.b16 %v74
    %v252 = vunpack.c.h.b16 %v74
    %v253 = vunpack.c.l.b16 %v75
    %v254 = vunpack.c.h.b16 %v75
    %v255 = vunpack.c.l.b16 %v76
    %v256 = vunpack.c.h.b16 %v76
    %v257 = vunpack.c.l.b16 %v77
    %v258 = vunpack.c.h.b16 %v77
    %v259 = vunpack.c.l.b16 %v78
    %v260 = vunpack.c.h.b16 %v78
    %v261 = vunpack.c.l.b16 %v79
    %v262 = vunpack.c.h.b16 %v79
    %v263 = vunpack.c.l.b16 %v80
    %v264 = vunpack.c.h.b16 %v80
    %v265 = vunpack.c.l.b16 %v81
    %v266 = vunpack.c.h.b16 %v81
    %v267 = vunpack.c.l.b16 %v82
    %v268 = vunpack.c.h.b16 %v82
    %v269 = vunpack.c.l.b16 %v83
    %v270 = vunpack.c.h.b16 %v83
    %v271 = vunpack.c.l.b16 %v84
    %v272 = vunpack.c.h.b16 %v84
    %v273 = vunpack.c.l.b16 %v85
    %v274 = vunpack.c.h.b16 %v85
    %v275 = vunpack.c.l.b16 %v86
    %v276 = vunpack.c.h.b16 %v86
    %v277 = vunpack.c.l.b16 %v87
    %v278 = vunpack.c.h.b16 %v87
    %v279 = vunpack.c.l.b16 %v88
    %v280 = vunpack.c.h.b16 %v88
    %v281 = vunpack.c.l.b16 %v89
    %v282 = vunpack.c.h.b16 %v89
    %v283 = vunpack.c.l.b16 %v90
    %v284 = vunpack.c.h.b16 %v90
    %v285 = vunpack.c.l.b16 %v91
    %v286 = vunpack.c.h.b16 %v91
    %v287 = vunpack.c.l.b16 %v92
    %v288 = vunpack.c.h.b16 %v92
    %v289 = vunpack.c.l.b16 %v93
    %v290 = vunpack.c.h.b16 %v93
    %v291 = vunpack.c.l.b16 %v94
    %v292 = vunpack.c.h.b16 %v94
    %v293 = vunpack.c.l.b16 %v95
    %v294 = vunpack.c.h.b16 %v95
    %v295 = vunpack.c.l.b16 %v96
    %v296 = vunpack.c.h.b16 %v96
    %v297 = vunpack.c.l.b16 %v97
    %v298 = vunpack.c.h.b16 %v97
    %v299 = vunpack.c.l.b16 %v98
    %v300 = vunpack.c.h.b16 %v98
    %v301 = vunpack.c.l.b16 %v99
    %v302 = vunpack.c.h.b16 %v99
    %v303 = vunpack.c.l.b16 %v100
    %v304 = vunpack.c.h.b16 %v100
    %v305 = vunpack.c.l.b16 %v101
    %v306 = vunpack.c.h.b16 %v101
    %v307 = vunpack.c.l.b16 %v102
    %v308 = vunpack.c.h.b16 %v102
    %v309 = vunpack.c.l.b16 %v103
    %v310 = vunpack.c.h.b16 %v103
    %v311 = vunpack.c.l.b16 %v104
    %v312 = vunpack.c.h.b16 %v104
    %v313 = vunpack.c.l.b16 %v105
    %v314 = vunpack.c.h.b16 %v105
    %v315 = vunpack.c.l.b16 %v106
    %v316 = vunpack.c.h.b16 %v106
    %v317 = vunpack.c.l.b16 %v107
    %v318 = vunpack.c.h.b16 %v107
    %v319 = vunpack.c.l.b16 %v108
    %v320 = vunpack.c.h.b16 %v108
    %v321 = vunpack.c.l.b16 %v109
    %v322 = vunpack.c.h.b16 %v109
    %v323 = vunpack.c.l.b16 %v110
    %v324 = vunpack.c.h.b16 %v110
    %v325 = vunpack.c.l.b16 %v111
    %v326 = vunpack.c.h.b16 %v111
    %v327 = vunpack.c.l.b16 %v112
    %v328 = vunpack.c.h.b16 %v112
    %v329 = vunpack.c.l.b16 %v113
    %v330 = vunpack.c.h.b16 %v113
    %v331 = vunpack.c.l.b16 %v114
    %v332 = vunpack.c.h.b16 %v114
    %v333 = vunpack.c.l.b16 %v115
    %v334 = vunpack.c.h.b16 %v115
    %v335 = vunpack.c.l.b16 %v116
    %v336 = vunpack.c.h.b16 %v116
    %v337 = vunpack.c.l.b16 %v117
    %v338 = vunpack.c.h.b16 %v117
    %v339 = vunpack.c.l.b16 %v118
    %v340 = vunpack.c.h.b16 %v118
    %v341 = vunpack.c.l.b16 %v119
    %v342 = vunpack.c.h.b16 %v119
    %v343 = vunpack.c.l.b16 %v120
    %v344 = vunpack.c.h.b16 %v120
    %v345 = vunpack.c.l.b16 %v121
    %v346 = vunpack.c.h.b16 %v121
    %v347 = vunpack.c.l.b16 %v122
    %v348 = vunpack.c.h.b16 %v122
    %v349 = vunpack.c.l.b16 %v123
    %v350 = vunpack.c.h.b16 %v123
    %v351 = vunpack.c.l.b16 %v124
    %v352 = vunpack.c.h.b16 %v124
    %v353 = vunpack.c.l.b16 %v125
    %v354 = vunpack.c.h.b16 %v125
    %v355 = vunpack.c.l.b16 %v126
    %v356 = vunpack.c.h.b16 %v126
    %v357 = vunpack.c.l.b16 %v127
    %v358 = vunpack.c.h.b16 %v127
    %v359 = vunpack.c.l.b16 %v128
    %v360 = vunpack.c.h.b16 %v128
    %v361 = vunpack.c.l.b16 %v129
    %v362 = vunpack.c.h.b16 %v129
    %v363 = vunpack.c.l.b16 %v130
    %v364 = vunpack.c.h.b16 %v130
    %v365 = vunpack.c.l.b16 %v131
    %v366 = vunpack.c.h.b16 %v131
    %v367 = vunpack.c.l.b16 %v132
    %v368 = vunpack.c.h.b16 %v132
    %v369 = vunpack.c.l.b16 %v133
    %v370 = vunpack.c.h.b16 %v133
    %v371 = vunpack.c.l.b16 %v134
    %v372 = vunpack.c.h.b16 %v134
    %v373 = vunpack.c.l.b16 %v135
    %v374 = vunpack.c.h.b16 %v135
    %v375 = vunpack.c.l.b16 %v136
    %v376 = vunpack.c.h.b16 %v136
    %v377 = vunpack.c.l.b16 %v137
    %v378 = vunpack.c.h.b16 %v137
    %v379 = vunpack.c.l.b16 %v138
    %v380 = vunpack.c.h.b16 %v138
    %v381 = vunpack.c.l.b16 %v139
    %v382 = vunpack.c.h.b16 %v139
    %v383 = vunpack.c.l.b16 %v140
    %v384 = vunpack.c.h.b16 %v140
    %v385 = vunpack.c.l.b16 %v141
    %v386 = vunpack.c.h.b16 %v141
    %v387 = vunpack.c.l.b16 %v142
    %v388 = vunpack.c.h.b16 %v142
    %v389 = vunpack.c.l.b16 %v143
    %v390 = vunpack.c.h.b16 %v143
    %v391 = vpack.c.b16 %v255, %v251
    %v392 = vpack.c.b16 %v256, %v252
    %v393 = vpack.c.b16 %v257, %v253
    %v394 = vpack.c.b16 %v258, %v254
    %v395 = vpack.c.b16 %v263, %v259
    %v396 = vpack.c.b16 %v264, %v260
    %v397 = vpack.c.b16 %v265, %v261
    %v398 = vpack.c.b16 %v266, %v262
    %v399 = vpack.c.b16 %v271, %v267
    %v400 = vpack.c.b16 %v272, %v268
    %v401 = vpack.c.b16 %v273, %v269
    %v402 = vpack.c.b16 %v274, %v270
    %v403 = vpack.c.b16 %v279, %v275
    %v404 = vpack.c.b16 %v280, %v276
    %v405 = vpack.c.b16 %v281, %v277
    %v406 = vpack.c.b16 %v282, %v278
    %v407 = vpack.c.b16 %v287, %v283
    %v408 = vpack.c.b16 %v288, %v284
    %v409 = vpack.c.b16 %v289, %v285
    %v410 = vpack.c.b16 %v290, %v286
    %v411 = vpack.c.b16 %v295, %v291
    %v412 = vpack.c.b16 %v296, %v292
    %v413 = vpack.c.b16 %v297, %v293
    %v414 = vpack.c.b16 %v298, %v294
    %v415 = vpack.c.b16 %v303, %v299
    %v416 = vpack.c.b16 %v304, %v300
    %v417 = vpack.c.b16 %v305, %v301
    %v418 = vpack.c.b16 %v306, %v302
    %v419 = vpack.c.b16 %v311, %v307
    %v420 = vpack.c.b16 %v312, %v308
    %v421 = vpack.c.b16 %v313, %v309
    %v422 = vpack.c.b16 %v314, %v310
    %v423 = vpack.c.b16 %v319, %v315
    %v424 = vpack.c.b16 %v320, %v316
    %v425 = vpack.c.b16 %v321, %v317
    %v426 = vpack.c.b16 %v322, %v318
    %v427 = vpack.c.b16 %v327, %v323
    %v428 = vpack.c.b16 %v328, %v324
    %v429 = vpack.c.b16 %v329, %v325
    %v430 = vpack.c.b16 %v330, %v326
    %v431 = vpack.c.b16 %v335, %v331
    %v432 = vpack.c.b16 %v336, %v332
    %v433 = vpack.c.b16 %v337, %v333
    %v434 = vpack.c.b16 %v338, %v334
    %v435 = vpack.c.b16 %v343, %v339
    %v436 = vpack.c.b16 %v344, %v340
    %v437 = vpack.c.b16 %v345, %v341
    %v438 = vpack.c.b16 %v346, %v342
    %v439 = vpack.c.b16 %v351, %v347
    %v440 = vpack.c.b16 %v352, %v348
    %v441 = vpack.c.b16 %v353, %v349
    %v442 = vpack.c.b16 %v354, %v350
    %v443 = vpack.c.b16 %v359, %v355
    %v444 = vpack.c.b16 %v360, %v356
    %v445 = vpack.c.b16 %v361, %v357
    %v446 = vpack.c.b16 %v362, %v358
    %v447 = vpack.c.b16 %v367, %v363
    %v448 = vpack.c.b16 %v368, %v364
    %v449 = vpack.c.b16 %v369, %v365
    %v450 = vpack.c.b16 %v370, %v366
    %v451 = vpack.c.b16 %v375, %v371
    %v452 = vpack.c.b16 %v376, %v372
    %v453 = vpack.c.b16 %v377, %v373
    %v454 = vpack.c.b16 %v378, %v374
    %v455 = vpack.c.b16 %v383, %v379
    %v456 = vpack.c.b16 %v384, %v380
    %v457 = vpack.c.b16 %v385, %v381
    %v458 = vpack.c.b16 %v386, %v382
    %v459 = vpack.c.b16 %v387, %v387
    %v460 = vpack.c.b16 %v388, %v388
    %v461 = vpack.c.b16 %v389, %v389
    %v462 = vpack.c.b16 %v390, %v390
    %vm531 = vcmask 195584
    %v533 = vsel %vm531, %v178, 0
    %vm535 = vcmask 1043456
    %v537 = vsel %vm535, %v459, 0
    %v540 = vsel %vm535, %v460, 0
    %v543 = vsel %vm535, %v461, 0
    %v546 = vsel %vm535, %v462, 0
    %548 = vmatprep.subr.bf16.mxu0 %v392
    %549 = vmatpush1.bf16.msra.mxu0 %v391
    %550 = vmatprep.subr.bf16.mxu0 %v396
    %551 = vmatpush1.bf16.msra.mxu0 %v395
    %552 = vmatprep.subr.bf16.mxu0 %v400
    %553 = vmatpush1.bf16.msra.mxu0 %v399
    %554 = vmatprep.subr.bf16.mxu0 %v404
    %555 = vmatpush1.bf16.msra.mxu0 %v403
    %556 = vmatprep.subr.bf16.mxu0 %v408
    %557 = vmatpush1.bf16.msra.mxu0 %v407
    %558 = vmatprep.subr.bf16.mxu0 %v412
    %559 = vmatpush1.bf16.msra.mxu0 %v411
    %560 = vmatprep.subr.bf16.mxu0 %v416
    %561 = vmatpush1.bf16.msra.mxu0 %v415
    %562 = vmatprep.subr.bf16.mxu0 %v420
    %563 = vmatpush1.bf16.msra.mxu0 %v419
    %564 = vmatprep.subr.bf16.mxu0 %v424
    %565 = vmatpush1.bf16.msra.mxu0 %v423
    %566 = vmatprep.subr.bf16.mxu0 %v428
    %567 = vmatpush1.bf16.msra.mxu0 %v427
    %568 = vmatprep.subr.bf16.mxu0 %v432
    %569 = vmatpush1.bf16.msra.mxu0 %v431
    %570 = vmatprep.subr.bf16.mxu0 %v436
    %571 = vmatpush1.bf16.msra.mxu0 %v435
    %572 = vmatprep.subr.bf16.mxu0 %v440
    %573 = vmatpush1.bf16.msra.mxu0 %v439
    %574 = vmatprep.subr.bf16.mxu0 %v444
    %575 = vmatpush1.bf16.msra.mxu0 %v443
    %576 = vmatprep.subr.bf16.mxu0 %v448
    %577 = vmatpush1.bf16.msra.mxu0 %v447
    %578 = vmatprep.subr.bf16.mxu0 %v452
    %579 = vmatpush1.bf16.msra.mxu0 %v451
    %580 = vmatprep.mubr.bf16.mxu0 %v177
    %581 = vmatmul.mubr.bf16.gmra.mrb[0].mxu0 %v176
    %v582 = vpop.f32.mrb[0].mxu0
    %v583 = vadd.f32 %v149, %v582
    %v584 = vpop.f32.mrb[0].mxu0
    %v585 = vadd.f32 %v153, %v584
    %v586 = vpop.f32.mrb[0].mxu0
    %v587 = vadd.f32 %v149, %v586
    %v588 = vpop.f32.mrb[0].mxu0
    %v589 = vadd.f32 %v153, %v588
    %590 = vdwg.mxu0
    %591 = vmatprep.subr.bf16.mxu0 %v456
    %592 = vmatpush1.bf16.msra.mxu0 %v455
    %593 = vmatprep.subr.bf16.mxu0 %v540
    %594 = vmatpush1.bf16.msra.mxu0 %v537
    %595 = vmatprep.subr.bf16.mxu0 0
    %596 = vmatpush1.bf16.msra.mxu0 0
    %597 = vmatprep.subr.bf16.mxu0 0
    %598 = vmatpush1.bf16.msra.mxu0 0
    %599 = vmatprep.subr.bf16.mxu0 0
    %600 = vmatpush1.bf16.msra.mxu0 0
    %601 = vmatprep.subr.bf16.mxu0 0
    %602 = vmatpush1.bf16.msra.mxu0 0
    %603 = vmatprep.subr.bf16.mxu0 0
    %604 = vmatpush1.bf16.msra.mxu0 0
    %605 = vmatprep.subr.bf16.mxu0 0
    %606 = vmatpush1.bf16.msra.mxu0 0
    %607 = vmatprep.subr.bf16.mxu0 0
    %608 = vmatpush1.bf16.msra.mxu0 0
    %609 = vmatprep.subr.bf16.mxu0 0
    %610 = vmatpush1.bf16.msra.mxu0 0
    %611 = vmatprep.subr.bf16.mxu0 0
    %612 = vmatpush1.bf16.msra.mxu0 0
    %613 = vmatprep.subr.bf16.mxu0 0
    %614 = vmatpush1.bf16.msra.mxu0 0
    %615 = vmatprep.subr.bf16.mxu0 0
    %616 = vmatpush1.bf16.msra.mxu0 0
    %617 = vmatprep.subr.bf16.mxu0 0
    %618 = vmatpush1.bf16.msra.mxu0 0
    %619 = vmatprep.subr.bf16.mxu0 0
    %620 = vmatpush1.bf16.msra.mxu0 0
    %621 = vmatprep.subr.bf16.mxu0 0
    %622 = vmatpush1.bf16.msra.mxu0 0
    %623 = vmatprep.mubr.bf16.mxu0 0
    %624 = vmatmul.mubr.bf16.gmra.mrb[0].mxu0 %v533
    %v625 = vpop.f32.mrb[0].mxu0
    %v626 = vadd.f32 %v583, %v625
    %v627 = vpop.f32.mrb[0].mxu0
    %v628 = vadd.f32 %v585, %v627
    %v629 = vpop.f32.mrb[0].mxu0
    %v630 = vadd.f32 %v587, %v629
    %v631 = vpop.f32.mrb[0].mxu0
    %v632 = vadd.f32 %v589, %v631
    %633 = vdwg.mxu0
    %634 = vmatprep.subr.bf16.mxu0 %v394
    %635 = vmatpush1.bf16.msra.mxu0 %v393
    %636 = vmatprep.subr.bf16.mxu0 %v398
    %637 = vmatpush1.bf16.msra.mxu0 %v397
    %638 = vmatprep.subr.bf16.mxu0 %v402
    %639 = vmatpush1.bf16.msra.mxu0 %v401
    %640 = vmatprep.subr.bf16.mxu0 %v406
    %641 = vmatpush1.bf16.msra.mxu0 %v405
    %642 = vmatprep.subr.bf16.mxu0 %v410
    %643 = vmatpush1.bf16.msra.mxu0 %v409
    %644 = vmatprep.subr.bf16.mxu0 %v414
    %645 = vmatpush1.bf16.msra.mxu0 %v413
    %646 = vmatprep.subr.bf16.mxu0 %v418
    %647 = vmatpush1.bf16.msra.mxu0 %v417
    %648 = vmatprep.subr.bf16.mxu0 %v422
    %649 = vmatpush1.bf16.msra.mxu0 %v421
    %650 = vmatprep.subr.bf16.mxu0 %v426
    %651 = vmatpush1.bf16.msra.mxu0 %v425
    %652 = vmatprep.subr.bf16.mxu0 %v430
    %653 = vmatpush1.bf16.msra.mxu0 %v429
    %654 = vmatprep.subr.bf16.mxu0 %v434
    %655 = vmatpush1.bf16.msra.mxu0 %v433
    %656 = vmatprep.subr.bf16.mxu0 %v438
    %657 = vmatpush1.bf16.msra.mxu0 %v437
    %658 = vmatprep.subr.bf16.mxu0 %v442
    %659 = vmatpush1.bf16.msra.mxu0 %v441
    %660 = vmatprep.subr.bf16.mxu0 %v446
    %661 = vmatpush1.bf16.msra.mxu0 %v445
    %662 = vmatprep.subr.bf16.mxu0 %v450
    %663 = vmatpush1.bf16.msra.mxu0 %v449
    %664 = vmatprep.subr.bf16.mxu0 %v454
    %665 = vmatpush1.bf16.msra.mxu0 %v453
    %666 = vmatprep.mubr.bf16.mxu0 %v177
    %667 = vmatmul.mubr.bf16.gmra.mrb[0].mxu0 %v176
    %v668 = vpop.f32.mrb[0].mxu0
    %v669 = vadd.f32 %v157, %v668
    %v670 = vpop.f32.mrb[0].mxu0
    %v671 = vadd.f32 %v161, %v670
    %v672 = vpop.f32.mrb[0].mxu0
    %v673 = vadd.f32 %v157, %v672
    %v674 = vpop.f32.mrb[0].mxu0
    %v675 = vadd.f32 %v161, %v674
    %676 = vdwg.mxu0
    %677 = vmatprep.subr.bf16.mxu0 %v458
    %678 = vmatpush1.bf16.msra.mxu0 %v457
    %679 = vmatprep.subr.bf16.mxu0 %v546
    %680 = vmatpush1.bf16.msra.mxu0 %v543
    %681 = vmatprep.subr.bf16.mxu0 0
    %682 = vmatpush1.bf16.msra.mxu0 0
    %683 = vmatprep.subr.bf16.mxu0 0
    %684 = vmatpush1.bf16.msra.mxu0 0
    %685 = vmatprep.subr.bf16.mxu0 0
    %686 = vmatpush1.bf16.msra.mxu0 0
    %687 = vmatprep.subr.bf16.mxu0 0
    %688 = vmatpush1.bf16.msra.mxu0 0
    %689 = vmatprep.subr.bf16.mxu0 0
    %690 = vmatpush1.bf16.msra.mxu0 0
    %691 = vmatprep.subr.bf16.mxu0 0
    %692 = vmatpush1.bf16.msra.mxu0 0
    %693 = vmatprep.subr.bf16.mxu0 0
    %694 = vmatpush1.bf16.msra.mxu0 0
    %695 = vmatprep.subr.bf16.mxu0 0
    %696 = vmatpush1.bf16.msra.mxu0 0
    %697 = vmatprep.subr.bf16.mxu0 0
    %698 = vmatpush1.bf16.msra.mxu0 0
    %699 = vmatprep.subr.bf16.mxu0 0
    %700 = vmatpush1.bf16.msra.mxu0 0
    %701 = vmatprep.subr.bf16.mxu0 0
    %702 = vmatpush1.bf16.msra.mxu0 0
    %703 = vmatprep.subr.bf16.mxu0 0
    %704 = vmatpush1.bf16.msra.mxu0 0
    %705 = vmatprep.subr.bf16.mxu0 0
    %706 = vmatpush1.bf16.msra.mxu0 0
    %707 = vmatprep.subr.bf16.mxu0 0
    %708 = vmatpush1.bf16.msra.mxu0 0
    %709 = vmatprep.mubr.bf16.mxu0 0
    %710 = vmatmul.mubr.bf16.gmra.mrb[0].mxu0 %v533
    %v711 = vpop.f32.mrb[0].mxu0
    %v712 = vadd.f32 %v669, %v711
    %v713 = vpop.f32.mrb[0].mxu0
    %v714 = vadd.f32 %v671, %v713
    %v715 = vpop.f32.mrb[0].mxu0
    %v716 = vadd.f32 %v673, %v715
    %v717 = vpop.f32.mrb[0].mxu0
    %v718 = vadd.f32 %v675, %v717
    %719 = vdwg.mxu0
    %v720 = vmax.f32 %v626, 0.0
    %v721 = vmax.f32 %v628, 0.0
    %v722 = vmax.f32 %v712, 0.0
    %v723 = vmax.f32 %v714, 0.0
    %v724 = vmax.f32 %v630, 0.0
    %v725 = vmax.f32 %v632, 0.0
    %v726 = vmax.f32 %v716, 0.0
    %v727 = vmax.f32 %v718, 0.0
    %v728 = vpack.c.bf16 %v724, %v720
    %v729 = vpack.c.bf16 %v725, %v721
    %v730 = vpack.c.bf16 %v726, %v722
    %v731 = vpack.c.bf16 %v727, %v723
    %v732 = vld [vmem:[#allocation7] sm:$0xff]
    %v733 = vld [vmem:[#allocation7 + $0x8] sm:$0xff]
    %v734 = vld [vmem:[#allocation7 + $0x10] sm:$0xff]
    %v735 = vld [vmem:[#allocation7 + $0x18] sm:$0xff]
    %v736 = vld [vmem:[#allocation7 + $0x20] sm:$0xff]
    %v737 = vld [vmem:[#allocation7 + $0x28] sm:$0xff]
    %v738 = vld [vmem:[#allocation7 + $0x30] sm:$0xff]
    %v739 = vld [vmem:[#allocation7 + $0x38] sm:$0xff]
    %v740 = vld [vmem:[#allocation7 + $0x40] sm:$0xff]
    %v741 = vld [vmem:[#allocation7 + $0x48] sm:$0xff]
    %v742 = vld [vmem:[#allocation7 + $0x50] sm:$0xff]
    %v743 = vld [vmem:[#allocation7 + $0x58] sm:$0xff]
    %v744 = vld [vmem:[#allocation7 + $0x60] sm:$0xff]
    %v745 = vld [vmem:[#allocation7 + $0x68] sm:$0xff]
    %v746 = vld [vmem:[#allocation7 + $0x70] sm:$0xff]
    %v747 = vld [vmem:[#allocation7 + $0x78] sm:$0xff]
    %v748 = vld [vmem:[#allocation7 + $0x80] sm:$0xff]
    %v749 = vld [vmem:[#allocation7 + $0x88] sm:$0xff]
    %v750 = vld [vmem:[#allocation7 + $0x90] sm:$0xff]
    %v751 = vld [vmem:[#allocation7 + $0x98] sm:$0xff]
    %v752 = vld [vmem:[#allocation7 + $0xa0] sm:$0xff]
    %v753 = vld [vmem:[#allocation7 + $0xa8] sm:$0xff]
    %v754 = vld [vmem:[#allocation7 + $0xb0] sm:$0xff]
    %v755 = vld [vmem:[#allocation7 + $0xb8] sm:$0xff]
    %v756 = vld [vmem:[#allocation7 + $0xc0] sm:$0xff]
    %v757 = vld [vmem:[#allocation7 + $0xc8] sm:$0xff]
    %v758 = vld [vmem:[#allocation7 + $0xd0] sm:$0xff]
    %v759 = vld [vmem:[#allocation7 + $0xd8] sm:$0xff]
    %v760 = vld [vmem:[#allocation7 + $0xe0] sm:$0xff]
    %v761 = vld [vmem:[#allocation7 + $0xe8] sm:$0xff]
    %v762 = vld [vmem:[#allocation7 + $0xf0] sm:$0xff]
    %v763 = vld [vmem:[#allocation7 + $0xf8] sm:$0xff]
    %v764 = vld [vmem:[#allocation7 + $0x100] sm:$0xff]
    %v765 = vld [vmem:[#allocation7 + $0x108] sm:$0xff]
    %v766 = vld [vmem:[#allocation7 + $0x110] sm:$0xff]
    %v767 = vld [vmem:[#allocation7 + $0x118] sm:$0xff]
    %v768 = vld [vmem:[#allocation7 + $0x120] sm:$0xff]
    %v769 = vld [vmem:[#allocation7 + $0x128] sm:$0xff]
    %v770 = vld [vmem:[#allocation7 + $0x130] sm:$0xff]
    %v771 = vld [vmem:[#allocation7 + $0x138] sm:$0xff]
    %v772 = vld [vmem:[#allocation7 + $0x140] sm:$0xff]
    %v773 = vld [vmem:[#allocation7 + $0x148] sm:$0xff]
    %v774 = vld [vmem:[#allocation7 + $0x150] sm:$0xff]
    %v775 = vld [vmem:[#allocation7 + $0x158] sm:$0xff]
    %v776 = vld [vmem:[#allocation7 + $0x160] sm:$0xff]
    %v777 = vld [vmem:[#allocation7 + $0x168] sm:$0xff]
    %v778 = vld [vmem:[#allocation7 + $0x170] sm:$0xff]
    %v779 = vld [vmem:[#allocation7 + $0x178] sm:$0xff]
    %v780 = vld [vmem:[#allocation7 + $0x180] sm:$0xff]
    %v781 = vld [vmem:[#allocation7 + $0x188] sm:$0xff]
    %v782 = vld [vmem:[#allocation7 + $0x190] sm:$0xff]
    %v783 = vld [vmem:[#allocation7 + $0x198] sm:$0xff]
    %v784 = vld [vmem:[#allocation7 + $0x1a0] sm:$0xff]
    %v785 = vld [vmem:[#allocation7 + $0x1a8] sm:$0xff]
    %v786 = vld [vmem:[#allocation7 + $0x1b0] sm:$0xff]
    %v787 = vld [vmem:[#allocation7 + $0x1b8] sm:$0xff]
    %v788 = vld [vmem:[#allocation7 + $0x1c0] sm:$0xff]
    %v789 = vld [vmem:[#allocation7 + $0x1c8] sm:$0xff]
    %v790 = vld [vmem:[#allocation7 + $0x1d0] sm:$0xff]
    %v791 = vld [vmem:[#allocation7 + $0x1d8] sm:$0xff]
    %v792 = vld [vmem:[#allocation7 + $0x1e0] sm:$0xff]
    %v793 = vld [vmem:[#allocation7 + $0x1e8] sm:$0xff]
    %v794 = vld [vmem:[#allocation7 + $0x1f0] sm:$0xff]
    %v795 = vld [vmem:[#allocation7 + $0x1f8] sm:$0xff]
    %v796 = vld [vmem:[%s4] sm:$0x3]
    %v798 = vlaneseq
    %v799 = vshrl.u32 %v798, 7
    %v800 = vsub.s32 0, %v799
    %v801 = vrot.slane %v796, %v800
    %v802 = vlaneseq
    %v803 = vshrl.u32 %v802, 7
    %v804 = vsub.s32 1, %v803
    %v805 = vrot.slane %v796, %v804
    %v872 = vunpack.c.l.b16 %v732
    %v873 = vunpack.c.h.b16 %v732
    %v874 = vunpack.c.l.b16 %v733
    %v875 = vunpack.c.h.b16 %v733
    %v876 = vunpack.c.l.b16 %v734
    %v877 = vunpack.c.h.b16 %v734
    %v878 = vunpack.c.l.b16 %v735
    %v879 = vunpack.c.h.b16 %v735
    %v880 = vunpack.c.l.b16 %v736
    %v881 = vunpack.c.h.b16 %v736
    %v882 = vunpack.c.l.b16 %v737
    %v883 = vunpack.c.h.b16 %v737
    %v884 = vunpack.c.l.b16 %v738
    %v885 = vunpack.c.h.b16 %v738
    %v886 = vunpack.c.l.b16 %v739
    %v887 = vunpack.c.h.b16 %v739
    %v888 = vunpack.c.l.b16 %v740
    %v889 = vunpack.c.h.b16 %v740
    %v890 = vunpack.c.l.b16 %v741
    %v891 = vunpack.c.h.b16 %v741
    %v892 = vunpack.c.l.b16 %v742
    %v893 = vunpack.c.h.b16 %v742
    %v894 = vunpack.c.l.b16 %v743
    %v895 = vunpack.c.h.b16 %v743
    %v896 = vunpack.c.l.b16 %v744
    %v897 = vunpack.c.h.b16 %v744
    %v898 = vunpack.c.l.b16 %v745
    %v899 = vunpack.c.h.b16 %v745
    %v900 = vunpack.c.l.b16 %v746
    %v901 = vunpack.c.h.b16 %v746
    %v902 = vunpack.c.l.b16 %v747
    %v903 = vunpack.c.h.b16 %v747
    %v904 = vunpack.c.l.b16 %v748
    %v905 = vunpack.c.h.b16 %v748
    %v906 = vunpack.c.l.b16 %v749
    %v907 = vunpack.c.h.b16 %v749
    %v908 = vunpack.c.l.b16 %v750
    %v909 = vunpack.c.h.b16 %v750
    %v910 = vunpack.c.l.b16 %v751
    %v911 = vunpack.c.h.b16 %v751
    %v912 = vunpack.c.l.b16 %v752
    %v913 = vunpack.c.h.b16 %v752
    %v914 = vunpack.c.l.b16 %v753
    %v915 = vunpack.c.h.b16 %v753
    %v916 = vunpack.c.l.b16 %v754
    %v917 = vunpack.c.h.b16 %v754
    %v918 = vunpack.c.l.b16 %v755
    %v919 = vunpack.c.h.b16 %v755
    %v920 = vunpack.c.l.b16 %v756
    %v921 = vunpack.c.h.b16 %v756
    %v922 = vunpack.c.l.b16 %v757
    %v923 = vunpack.c.h.b16 %v757
    %v924 = vunpack.c.l.b16 %v758
    %v925 = vunpack.c.h.b16 %v758
    %v926 = vunpack.c.l.b16 %v759
    %v927 = vunpack.c.h.b16 %v759
    %v928 = vunpack.c.l.b16 %v760
    %v929 = vunpack.c.h.b16 %v760
    %v930 = vunpack.c.l.b16 %v761
    %v931 = vunpack.c.h.b16 %v761
    %v932 = vunpack.c.l.b16 %v762
    %v933 = vunpack.c.h.b16 %v762
    %v934 = vunpack.c.l.b16 %v763
    %v935 = vunpack.c.h.b16 %v763
    %v936 = vunpack.c.l.b16 %v764
    %v937 = vunpack.c.h.b16 %v764
    %v938 = vunpack.c.l.b16 %v765
    %v939 = vunpack.c.h.b16 %v765
    %v940 = vunpack.c.l.b16 %v766
    %v941 = vunpack.c.h.b16 %v766
    %v942 = vunpack.c.l.b16 %v767
    %v943 = vunpack.c.h.b16 %v767
    %v944 = vunpack.c.l.b16 %v768
    %v945 = vunpack.c.h.b16 %v768
    %v946 = vunpack.c.l.b16 %v769
    %v947 = vunpack.c.h.b16 %v769
    %v948 = vunpack.c.l.b16 %v770
    %v949 = vunpack.c.h.b16 %v770
    %v950 = vunpack.c.l.b16 %v771
    %v951 = vunpack.c.h.b16 %v771
    %v952 = vunpack.c.l.b16 %v772
    %v953 = vunpack.c.h.b16 %v772
    %v954 = vunpack.c.l.b16 %v773
    %v955 = vunpack.c.h.b16 %v773
    %v956 = vunpack.c.l.b16 %v774
    %v957 = vunpack.c.h.b16 %v774
    %v958 = vunpack.c.l.b16 %v775
    %v959 = vunpack.c.h.b16 %v775
    %v960 = vunpack.c.l.b16 %v776
    %v961 = vunpack.c.h.b16 %v776
    %v962 = vunpack.c.l.b16 %v777
    %v963 = vunpack.c.h.b16 %v777
    %v964 = vunpack.c.l.b16 %v778
    %v965 = vunpack.c.h.b16 %v778
    %v966 = vunpack.c.l.b16 %v779
    %v967 = vunpack.c.h.b16 %v779
    %v968 = vunpack.c.l.b16 %v780
    %v969 = vunpack.c.h.b16 %v780
    %v970 = vunpack.c.l.b16 %v781
    %v971 = vunpack.c.h.b16 %v781
    %v972 = vunpack.c.l.b16 %v782
    %v973 = vunpack.c.h.b16 %v782
    %v974 = vunpack.c.l.b16 %v783
    %v975 = vunpack.c.h.b16 %v783
    %v976 = vunpack.c.l.b16 %v784
    %v977 = vunpack.c.h.b16 %v784
    %v978 = vunpack.c.l.b16 %v785
    %v979 = vunpack.c.h.b16 %v785
    %v980 = vunpack.c.l.b16 %v786
    %v981 = vunpack.c.h.b16 %v786
    %v982 = vunpack.c.l.b16 %v787
    %v983 = vunpack.c.h.b16 %v787
    %v984 = vunpack.c.l.b16 %v788
    %v985 = vunpack.c.h.b16 %v788
    %v986 = vunpack.c.l.b16 %v789
    %v987 = vunpack.c.h.b16 %v789
    %v988 = vunpack.c.l.b16 %v790
    %v989 = vunpack.c.h.b16 %v790
    %v990 = vunpack.c.l.b16 %v791
    %v991 = vunpack.c.h.b16 %v791
    %v992 = vunpack.c.l.b16 %v792
    %v993 = vunpack.c.h.b16 %v792
    %v994 = vunpack.c.l.b16 %v793
    %v995 = vunpack.c.h.b16 %v793
    %v996 = vunpack.c.l.b16 %v794
    %v997 = vunpack.c.h.b16 %v794
    %v998 = vunpack.c.l.b16 %v795
    %v999 = vunpack.c.h.b16 %v795
    %v1000 = vpack.c.b16 %v874, %v872
    %v1001 = vpack.c.b16 %v875, %v873
    %v1002 = vpack.c.b16 %v878, %v876
    %v1003 = vpack.c.b16 %v879, %v877
    %v1004 = vpack.c.b16 %v882, %v880
    %v1005 = vpack.c.b16 %v883, %v881
    %v1006 = vpack.c.b16 %v886, %v884
    %v1007 = vpack.c.b16 %v887, %v885
    %v1008 = vpack.c.b16 %v890, %v888
    %v1009 = vpack.c.b16 %v891, %v889
    %v1010 = vpack.c.b16 %v894, %v892
    %v1011 = vpack.c.b16 %v895, %v893
    %v1012 = vpack.c.b16 %v898, %v896
    %v1013 = vpack.c.b16 %v899, %v897
    %v1014 = vpack.c.b16 %v902, %v900
    %v1015 = vpack.c.b16 %v903, %v901
    %v1016 = vpack.c.b16 %v906, %v904
    %v1017 = vpack.c.b16 %v907, %v905
    %v1018 = vpack.c.b16 %v910, %v908
    %v1019 = vpack.c.b16 %v911, %v909
    %v1020 = vpack.c.b16 %v914, %v912
    %v1021 = vpack.c.b16 %v915, %v913
    %v1022 = vpack.c.b16 %v918, %v916
    %v1023 = vpack.c.b16 %v919, %v917
    %v1024 = vpack.c.b16 %v922, %v920
    %v1025 = vpack.c.b16 %v923, %v921
    %v1026 = vpack.c.b16 %v926, %v924
    %v1027 = vpack.c.b16 %v927, %v925
    %v1028 = vpack.c.b16 %v930, %v928
    %v1029 = vpack.c.b16 %v931, %v929
    %v1030 = vpack.c.b16 %v934, %v932
    %v1031 = vpack.c.b16 %v935, %v933
    %v1032 = vpack.c.b16 %v938, %v936
    %v1033 = vpack.c.b16 %v939, %v937
    %v1034 = vpack.c.b16 %v942, %v940
    %v1035 = vpack.c.b16 %v943, %v941
    %v1036 = vpack.c.b16 %v946, %v944
    %v1037 = vpack.c.b16 %v947, %v945
    %v1038 = vpack.c.b16 %v950, %v948
    %v1039 = vpack.c.b16 %v951, %v949
    %v1040 = vpack.c.b16 %v954, %v952
    %v1041 = vpack.c.b16 %v955, %v953
    %v1042 = vpack.c.b16 %v958, %v956
    %v1043 = vpack.c.b16 %v959, %v957
    %v1044 = vpack.c.b16 %v962, %v960
    %v1045 = vpack.c.b16 %v963, %v961
    %v1046 = vpack.c.b16 %v966, %v964
    %v1047 = vpack.c.b16 %v967, %v965
    %v1048 = vpack.c.b16 %v970, %v968
    %v1049 = vpack.c.b16 %v971, %v969
    %v1050 = vpack.c.b16 %v974, %v972
    %v1051 = vpack.c.b16 %v975, %v973
    %v1052 = vpack.c.b16 %v978, %v976
    %v1053 = vpack.c.b16 %v979, %v977
    %v1054 = vpack.c.b16 %v982, %v980
    %v1055 = vpack.c.b16 %v983, %v981
    %v1056 = vpack.c.b16 %v986, %v984
    %v1057 = vpack.c.b16 %v987, %v985
    %v1058 = vpack.c.b16 %v990, %v988
    %v1059 = vpack.c.b16 %v991, %v989
    %v1060 = vpack.c.b16 %v994, %v992
    %v1061 = vpack.c.b16 %v995, %v993
    %v1062 = vpack.c.b16 %v998, %v996
    %v1063 = vpack.c.b16 %v999, %v997
    %1128 = vmatprep.subr.bf16.mxu0 %v1001
    %1129 = vmatpush1.bf16.msra.mxu0 %v1000
    %1130 = vmatprep.subr.bf16.mxu0 %v1003
    %1131 = vmatpush1.bf16.msra.mxu0 %v1002
    %1132 = vmatprep.subr.bf16.mxu0 %v1005
    %1133 = vmatpush1.bf16.msra.mxu0 %v1004
    %1134 = vmatprep.subr.bf16.mxu0 %v1007
    %1135 = vmatpush1.bf16.msra.mxu0 %v1006
    %1136 = vmatprep.subr.bf16.mxu0 %v1009
    %1137 = vmatpush1.bf16.msra.mxu0 %v1008
    %1138 = vmatprep.subr.bf16.mxu0 %v1011
    %1139 = vmatpush1.bf16.msra.mxu0 %v1010
    %1140 = vmatprep.subr.bf16.mxu0 %v1013
    %1141 = vmatpush1.bf16.msra.mxu0 %v1012
    %1142 = vmatprep.subr.bf16.mxu0 %v1015
    %1143 = vmatpush1.bf16.msra.mxu0 %v1014
    %1144 = vmatprep.subr.bf16.mxu0 %v1017
    %1145 = vmatpush1.bf16.msra.mxu0 %v1016
    %1146 = vmatprep.subr.bf16.mxu0 %v1019
    %1147 = vmatpush1.bf16.msra.mxu0 %v1018
    %1148 = vmatprep.subr.bf16.mxu0 %v1021
    %1149 = vmatpush1.bf16.msra.mxu0 %v1020
    %1150 = vmatprep.subr.bf16.mxu0 %v1023
    %1151 = vmatpush1.bf16.msra.mxu0 %v1022
    %1152 = vmatprep.subr.bf16.mxu0 %v1025
    %1153 = vmatpush1.bf16.msra.mxu0 %v1024
    %1154 = vmatprep.subr.bf16.mxu0 %v1027
    %1155 = vmatpush1.bf16.msra.mxu0 %v1026
    %1156 = vmatprep.subr.bf16.mxu0 %v1029
    %1157 = vmatpush1.bf16.msra.mxu0 %v1028
    %1158 = vmatprep.subr.bf16.mxu0 %v1031
    %1159 = vmatpush1.bf16.msra.mxu0 %v1030
    %1160 = vmatprep.mubr.bf16.mxu0 %v729
    %1161 = vmatmul.mubr.bf16.gmra.mrb[0].mxu0 %v728
    %v1162 = vpop.f32.mrb[0].mxu0
    %v1163 = vadd.f32 %v801, %v1162
    %v1164 = vpop.f32.mrb[0].mxu0
    %v1165 = vadd.f32 %v805, %v1164
    %v1166 = vpop.f32.mrb[0].mxu0
    %v1167 = vadd.f32 %v801, %v1166
    %v1168 = vpop.f32.mrb[0].mxu0
    %v1169 = vadd.f32 %v805, %v1168
    %1170 = vdwg.mxu0
    %1171 = vmatprep.subr.bf16.mxu0 %v1033
    %1172 = vmatpush1.bf16.msra.mxu0 %v1032
    %1173 = vmatprep.subr.bf16.mxu0 %v1035
    %1174 = vmatpush1.bf16.msra.mxu0 %v1034
    %1175 = vmatprep.subr.bf16.mxu0 %v1037
    %1176 = vmatpush1.bf16.msra.mxu0 %v1036
    %1177 = vmatprep.subr.bf16.mxu0 %v1039
    %1178 = vmatpush1.bf16.msra.mxu0 %v1038
    %1179 = vmatprep.subr.bf16.mxu0 %v1041
    %1180 = vmatpush1.bf16.msra.mxu0 %v1040
    %1181 = vmatprep.subr.bf16.mxu0 %v1043
    %1182 = vmatpush1.bf16.msra.mxu0 %v1042
    %1183 = vmatprep.subr.bf16.mxu0 %v1045
    %1184 = vmatpush1.bf16.msra.mxu0 %v1044
    %1185 = vmatprep.subr.bf16.mxu0 %v1047
    %1186 = vmatpush1.bf16.msra.mxu0 %v1046
    %1187 = vmatprep.subr.bf16.mxu0 %v1049
    %1188 = vmatpush1.bf16.msra.mxu0 %v1048
    %1189 = vmatprep.subr.bf16.mxu0 %v1051
    %1190 = vmatpush1.bf16.msra.mxu0 %v1050
    %1191 = vmatprep.subr.bf16.mxu0 %v1053
    %1192 = vmatpush1.bf16.msra.mxu0 %v1052
    %1193 = vmatprep.subr.bf16.mxu0 %v1055
    %1194 = vmatpush1.bf16.msra.mxu0 %v1054
    %1195 = vmatprep.subr.bf16.mxu0 %v1057
    %1196 = vmatpush1.bf16.msra.mxu0 %v1056
    %1197 = vmatprep.subr.bf16.mxu0 %v1059
    %1198 = vmatpush1.bf16.msra.mxu0 %v1058
    %1199 = vmatprep.subr.bf16.mxu0 %v1061
    %1200 = vmatpush1.bf16.msra.mxu0 %v1060
    %1201 = vmatprep.subr.bf16.mxu0 %v1063
    %1202 = vmatpush1.bf16.msra.mxu0 %v1062
    %1203 = vmatprep.mubr.bf16.mxu0 %v731
    %1204 = vmatmul.mubr.bf16.gmra.mrb[0].mxu0 %v730
    %v1205 = vpop.f32.mrb[0].mxu0
    %v1206 = vadd.f32 %v1163, %v1205
    %v1207 = vpop.f32.mrb[0].mxu0
    %v1208 = vadd.f32 %v1165, %v1207
    %v1209 = vpop.f32.mrb[0].mxu0
    %v1210 = vadd.f32 %v1167, %v1209
    %v1211 = vpop.f32.mrb[0].mxu0
    %v1212 = vadd.f32 %v1169, %v1211
    %1213 = vdwg.mxu0
    %v1214 = vmax.f32 %v1206, 0.0
    %v1215 = vmax.f32 %v1208, 0.0
    %v1216 = vmax.f32 %v1210, 0.0
    %v1217 = vmax.f32 %v1212, 0.0
    %v1218 = vld [vmem:[%s5] sm:$0x3]
    %v1220 = vlaneseq
    %v1221 = vshrl.u32 %v1220, 7
    %v1222 = vsub.s32 0, %v1221
    %v1223 = vrot.slane %v1218, %v1222
    %v1224 = vlaneseq
    %v1225 = vshrl.u32 %v1224, 7
    %v1226 = vsub.s32 1, %v1225
    %v1227 = vrot.slane %v1218, %v1226
    %v1230 = vmul.f32 %v1214, %v1223
    %v1231 = vmul.f32 %v1215, %v1227
    %v1232 = vmul.f32 %v1216, %v1223
    %v1233 = vmul.f32 %v1217, %v1227
    %v1234 = vadd.f32 %v1230, %v1231
    %1235 = vadd.xlane.f32.xlu0 %v1234
    %v1236 = vpop.xlane.xlu0 %1235
    %v1237 = vadd.f32 %v1232, %v1233
    %1238 = vadd.xlane.f32.xlu0 %v1237
    %v1239 = vpop.xlane.xlu0 %1238
    %v1240 = vld [vmem:[#allocation2] sm:$0x1]
    %v1242 = vlaneseq
    %v1243 = vshrl.u32 %v1242, 7
    %v1244 = vsub.s32 0, %v1243
    %v1245 = vrot.slane %v1240, %v1244
    %1246 = vset.pattern.permute.xlu0 0
    %1247 = vperm.xlu0 %1246, %v1245
    %v1248 = vpop.permute.xlu0 %1247
    %v1250 = vadd.f32 %v1236, %v1248
    %v1251 = vadd.f32 %v1239, %v1248
    %v1254 = vlaneseq
    %v1255 = vand.u32 %v1254, 127
    %v1256 = vlaneseq
    %v1257 = vshrl.u32 %v1256, 7
    %v1258 = vsub.s32 %v1255, %v1257
    %v1259 = vrot.slane %v1250, %v1258
    %v1260 = vlaneseq
    %v1261 = vshrl.u32 %v1260, 7
    %v1262 = vsub.s32 %v1255, %v1261
    %v1263 = vrot.slane %v1251, %v1262
    %vm1264 = vcmask 1041409
    %v1265 = vsel %vm1264, %v1263, %v1259
    %1267 = vxpose.xlu0.b32.start [1/16] %v1265, 128
    %1268 = vxpose.xlu0.b32.cont [2/16] 0.0, 128
    %1269 = vxpose.xlu0.b32.cont [3/16] 0.0, 128
    %1270 = vxpose.xlu0.b32.cont [4/16] 0.0, 128
    %1271 = vxpose.xlu0.b32.cont [5/16] 0.0, 128
    %1272 = vxpose.xlu0.b32.cont [6/16] 0.0, 128
    %1273 = vxpose.xlu0.b32.cont [7/16] 0.0, 128
    %1274 = vxpose.xlu0.b32.cont [8/16] 0.0, 128
    %1275 = vxpose.xlu0.b32.cont [9/16] 0.0, 128
    %1276 = vxpose.xlu0.b32.cont [10/16] 0.0, 128
    %1277 = vxpose.xlu0.b32.cont [11/16] 0.0, 128
    %1278 = vxpose.xlu0.b32.cont [12/16] 0.0, 128
    %1279 = vxpose.xlu0.b32.cont [13/16] 0.0, 128
    %1280 = vxpose.xlu0.b32.cont [14/16] 0.0, 128
    %1281 = vxpose.xlu0.b32.cont [15/16] 0.0, 128
    %1282 = vxpose.xlu0.b32.end [16/16] 0.0, 128
    %v1283 = vpop.trf.xlu0
    %v1284 = vpop.trf.xlu0
    %v1285 = vpop.trf.xlu0
    %v1286 = vpop.trf.xlu0
    %v1287 = vpop.trf.xlu0
    %v1288 = vpop.trf.xlu0
    %v1289 = vpop.trf.xlu0
    %v1290 = vpop.trf.xlu0
    %v1291 = vpop.trf.xlu0
    %v1292 = vpop.trf.xlu0
    %v1293 = vpop.trf.xlu0
    %v1294 = vpop.trf.xlu0
    %v1295 = vpop.trf.xlu0
    %v1296 = vpop.trf.xlu0
    %v1297 = vpop.trf.xlu0
    %v1298 = vpop.trf.xlu0
    %vm1299 = vcmask 15360
    %v1300 = vsel %vm1299, %v1283, -inf
    %v1301 = vrot.slane %v1300, 4
    %v1302 = vmax.f32 %v1300, %v1301
    %v1303 = vrot.slane %v1302, 2
    %v1304 = vmax.f32 %v1302, %v1303
    %v1305 = vrot.slane %v1304, 1
    %v1306 = vmax.f32 %v1304, %v1305
    %v1307 = vsub.f32 %v1283, %v1306
    %v1308 = vmul.f32 %v1307, 1.442695
    %v1309 = vpow.pop %v1308
    %v1310 = vsel %vm1299, %v1309, 0.0
    %v1311 = vrot.slane %v1310, 4
    %v1312 = vadd.f32 %v1310, %v1311
    %v1313 = vrot.slane %v1312, 2
    %v1314 = vadd.f32 %v1312, %v1313
    %v1315 = vrot.slane %v1314, 1
    %v1316 = vadd.f32 %v1314, %v1315
    %v1317 = vrcp.pop %v1316
    %v1318 = vmul.f32 %v1309, %v1317
    %1319 = vst.msk [vmem:[%s7] sm:$0xff] %vm1299, %v1318
    // Predicated region
    $region42: #{tpu_custom_call.1} parent=1 // pred_check
      _
    $region43: #{tpu_custom_call.1} parent=1 // pred_check_branch
      %1321 = sbr.rel (0) target = $region45
    $region44: #{tpu_custom_call.1} parent=1 // pred_region
      _
    $region45: #{tpu_custom_call.1} parent=1 // pred_fallthru
      _
    // Predicated region
    $region46: #{tpu_custom_call.1} parent=1 // pred_check
      _
    $region47: #{tpu_custom_call.1} parent=1 // pred_check_branch
      %1323 = sbr.rel (0) target = $region49
    $region48: #{tpu_custom_call.1} parent=1 // pred_region
      _
    $region49: #{tpu_custom_call.1} parent=1 // pred_fallthru
      _
    %1324 = vsyncpa [#allocation4], 1
    %1325 = vsyncpa [#allocation6], 1

</llo_original>
